<compile_context>
chip_gen: v6e
topology: v6e:2x2x1
jax: 0.10.0
libtpu: 0.0.40
codegen_flags: <defaults>
</compile_context>

<pallas_src>
import jax
import jax.numpy as jnp
from jax.experimental import pallas as pl
from jax.experimental.pallas import tpu as pltpu


def _round_up(x, m):
    return (x + m - 1) // m * m


def _tpu_vmem_and_kind():
    """Best-effort hardware query; falls back to the most conservative (v7x) VMEM size."""
    try:
        vmem_cap = int(pltpu.get_tpu_info().vmem_capacity_bytes)
    except Exception:
        vmem_cap = 64 * 1024 * 1024
    try:
        kind = jax.devices()[0].device_kind.lower()
    except Exception:
        kind = ""
    return vmem_cap, kind


def _vmem_footprint(tm, tv, k, dp):
    """Rough per-step VMEM bytes: double-buffered bf16 tiles + fp32 scratch + fp32 temps."""
    bf16, f32, dbl = 2, 4, 2
    tiles = dbl * (tm * k + k * tv + tv * dp + tm * dp) * bf16     # x, w1, emb in; out
    scratch = tm * dp * f32 + 2 * tm * 128 * f32                   # acc + lane-padded m/l
    temps = 2 * tm * tv * f32                                      # logits + p
    return tiles + scratch + temps


def _select_tiles(k, dp, vmem_cap, kind):
    """Pick (tm, tv): large row tiles to amortize weight streaming (v6e/v7x roofline),
    capped by a VMEM budget; on v5e keep tm=256 (already near its balance point) and
    spend spare VMEM on tv instead."""
    budget = int(vmem_cap * 0.55)
    tm_cands = (256, 128) if ("v5" in kind) else (1024, 768, 512, 256, 128)
    for tm in tm_cands:
        for tv in (1024, 512, 256):
            if _vmem_footprint(tm, tv, k, dp) <= budget:
                return tm, tv
    return 128, 256


def _embedding_table_kernel(x_ref, w1_ref, emb_ref, o_ref, m_scr, l_scr, acc_scr):
    """Grid = (row_tiles, vocab_tiles); vocab is the (innermost) reduction axis."""
    v = pl.program_id(1)

    @pl.when(v == 0)
    def _init():
        m_scr[...] = jnp.full_like(m_scr, -jnp.inf)
        l_scr[...] = jnp.zeros_like(l_scr)
        acc_scr[...] = jnp.zeros_like(acc_scr)

    # --- Linear on this vocab tile (bias folded into w1's last row / x's ones column) ---
    logits = jnp.dot(x_ref[...], w1_ref[...], preferred_element_type=jnp.float32)

    # --- Online (flash-style) softmax accumulation over vocab tiles ---
    m_prev = m_scr[...]
    m_new = jnp.maximum(m_prev, jnp.max(logits, axis=-1, keepdims=True))
    alpha = jnp.exp(m_prev - m_new)                       # rescale old state
    p = jnp.exp(logits - m_new)                           # unnormalized probs, fp32
    l_scr[...] = alpha * l_scr[...] + jnp.sum(p, axis=-1, keepdims=True)
    # Probabilistic "embedding lookup" contribution of this vocab tile (bf16 MXU, f32 acc).
    acc_scr[...] = alpha * acc_scr[...] + jnp.dot(
        p.astype(jnp.bfloat16), emb_ref[...], preferred_element_type=jnp.float32
    )
    m_scr[...] = m_new

    @pl.when(v == pl.num_programs(1) - 1)
    def _finalize():
        inv_l = pl.reciprocal(l_scr[...], approx=True)    # EUP slot, off the VPU path
        o_ref[...] = (acc_scr[...] * inv_l).astype(o_ref.dtype)


def embedding_table_forward(x_aug, w1_aug, emb_pad, *, tm, tv, out_dim,
                            vmem_limit_bytes):
    """x_aug:  [M, K] bf16 (K = in_dim + 1, last column == 1.0 = bias lane)
       w1_aug: [K, Vp] bf16 (last row = bias; padded vocab cols carry -1e30 in the bias row)
       emb_pad:[Vp, Dp] bf16 (zero padded, Dp multiple of 128)
       Returns [M, out_dim] bf16."""
    M, K = x_aug.shape
    Vp, Dp = emb_pad.shape
    assert w1_aug.shape == (K, Vp)
    assert Vp % tv == 0 and Dp % 128 == 0

    # --- row tile: shrink (but keep sublane alignment) for tiny M ---
    tm_eff = min(tm, _round_up(M, 16))
    # Keep >= 2 row tiles when M is big enough so both TensorCores of a dual-core chip
    # (v7x) stay busy; near-neutral on single-core chips (v5e/v6e).
    if M >= 256 and _round_up(M, tm_eff) // tm_eff < 2:
        tm_eff = _round_up((M + 1) // 2, 16)

    Mp = _round_up(M, tm_eff)
    if Mp != M:
        # Zero rows (including the ones column) are harmless: finite logits, sliced off below.
        x_aug = jnp.pad(x_aug, ((0, Mp - M), (0, 0)))

    grid = (Mp // tm_eff, Vp // tv)

    cost = pl.CostEstimate(
        flops=int(2 * Mp * K * Vp + 2 * Mp * Vp * Dp),
        transcendentals=int(Mp * Vp + Mp * grid[1]),
        # w1 and emb are re-streamed from HBM once per row tile.
        bytes_accessed=int(Mp * K * 2
                           + grid[0] * (w1_aug.size + emb_pad.size) * 2
                           + Mp * Dp * 2),
    )

    out = pl.pallas_call(
        _embedding_table_kernel,
        out_shape=jax.ShapeDtypeStruct((Mp, Dp), jnp.bfloat16),
        grid_spec=pltpu.PrefetchScalarGridSpec(
            num_scalar_prefetch=0,
            grid=grid,
            in_specs=[
                pl.BlockSpec((tm_eff, K), lambda i, v: (i, 0)),    # x rows (+ bias lane)
                pl.BlockSpec((K, tv), lambda i, v: (0, v)),        # w1 vocab tile (bias row folded)
                pl.BlockSpec((tv, Dp), lambda i, v: (v, 0)),       # emb vocab tile
            ],
            out_specs=pl.BlockSpec((tm_eff, Dp), lambda i, v: (i, 0)),
            scratch_shapes=[
                pltpu.VMEM((tm_eff, 1), jnp.float32),    # running max
                pltpu.VMEM((tm_eff, 1), jnp.float32),    # running denominator
                pltpu.VMEM((tm_eff, Dp), jnp.float32),   # fp32 output accumulator
            ],
        ),
        compiler_params=pltpu.CompilerParams(
            dimension_semantics=("parallel", "arbitrary"),
            vmem_limit_bytes=int(vmem_limit_bytes),
        ),
        cost_estimate=cost,
    )(x_aug, w1_aug, emb_pad)

    return out[:M, :out_dim]


class EmbeddingTableJAX:
    """Deterministic JAX re-implementation of EmbeddingTable's forward (float-input path)."""
    # TODO(synk): integer-token path of ProbalisticTokenEmbedding (plain index lookup) is not
    # exercised by EmbeddingTable.forward and is not implemented here.

    def __init__(self, in_dim, out_dim, vocab_size, padding_idx=None, key=None):
        key = jax.random.PRNGKey(0) if key is None else key
        k1, k2, k3 = jax.random.split(key, 3)
        # nn.Linear default init ~ uniform(-1/sqrt(in_dim), 1/sqrt(in_dim))
        bound = 1.0 / jnp.sqrt(jnp.float32(in_dim))
        self.w1 = jax.random.uniform(
            k1, (in_dim, vocab_size), jnp.float32, -bound, bound
        ).astype(jnp.bfloat16)
        self.b1 = jax.random.uniform(
            k2, (1, vocab_size), jnp.float32, -bound, bound
        ).astype(jnp.bfloat16)
        # ProbalisticTokenEmbedding.reset_parameters: normal(0, 1), padding row zeroed
        emb = jax.random.normal(k3, (vocab_size, out_dim), jnp.float32)
        if padding_idx is not None:
            emb = emb.at[padding_idx].set(0.0)
        self.emb = emb.astype(jnp.bfloat16)
        self.in_dim, self.out_dim, self.vocab_size = in_dim, out_dim, vocab_size

        # ---- one-time padding / casting / bias folding (never redone per forward) ----
        K = in_dim + 1                                   # +1 = folded bias lane
        Dp = _round_up(out_dim, 128)                     # lane-dense output (no masked vst)
        vmem_cap, kind = _tpu_vmem_and_kind()
        tm, tv = _select_tiles(K, Dp, vmem_cap, kind)
        tv = min(tv, _round_up(vocab_size, 128))         # shrink for tiny vocab, keep lane alignment
        Vp = _round_up(vocab_size, tv)

        w1_aug = jnp.concatenate([self.w1, self.b1], axis=0)        # [K, vocab]
        if Vp != vocab_size:
            # Padded vocab columns get a huge negative "bias" so exp() underflows to exactly 0.
            # Safe because round_up guarantees every vocab tile holds >= 1 real column.
            pad_cols = jnp.concatenate(
                [jnp.zeros((K - 1, Vp - vocab_size), jnp.bfloat16),
                 jnp.full((1, Vp - vocab_size), -1e30, jnp.bfloat16)], axis=0)
            w1_aug = jnp.concatenate([w1_aug, pad_cols], axis=1)
        emb_pad = jnp.pad(self.emb, ((0, Vp - vocab_size), (0, Dp - out_dim)))

        self._w1_aug = w1_aug
        self._emb_pad = emb_pad
        self._tm, self._tv, self._Dp = tm, tv, Dp
        self._vmem_limit = int(vmem_cap * 0.85)

    def __call__(self, x):
        # x: [..., in_dim] float; autocast(bfloat16) semantics.
        lead = x.shape[:-1]
        x2d = x.reshape(-1, self.in_dim).astype(jnp.bfloat16)
        ones = jnp.ones((x2d.shape[0], 1), jnp.bfloat16)   # bias lane
        x_aug = jnp.concatenate([x2d, ones], axis=-1)
        out = embedding_table_forward(
            x_aug, self._w1_aug, self._emb_pad,
            tm=self._tm, tv=self._tv, out_dim=self.out_dim,
            vmem_limit_bytes=self._vmem_limit)
        return out.reshape(*lead, self.out_dim)


def _reference(x, module):
    """Pure-JAX reference matching autocast(bf16) semantics."""
    xf = x.reshape(-1, module.in_dim).astype(jnp.bfloat16).astype(jnp.float32)
    logits = xf @ module.w1.astype(jnp.float32) + module.b1.astype(jnp.float32)
    probs = jax.nn.softmax(logits, axis=-1)
    out = (probs.astype(jnp.bfloat16).astype(jnp.float32)
           @ module.emb.astype(jnp.float32)).astype(jnp.bfloat16)
    return out.reshape(*x.shape[:-1], module.out_dim)


if __name__ == "__main__":
    # Small shapes: batch=2, seq=8, in_dim=32, vocab_size=256, out_dim=64
    batch, seq, in_dim, vocab, out_dim = 2, 8, 32, 256, 64
    key = jax.random.PRNGKey(0)
    kx, kp = jax.random.split(key)
    x = jax.random.normal(kx, (batch, seq, in_dim), jnp.float32)

    module = EmbeddingTableJAX(in_dim, out_dim, vocab, padding_idx=0, key=kp)
    y = jax.block_until_ready(module(x))

    ref = _reference(x, module)
    assert y.shape == (batch, seq, out_dim) and y.dtype == jnp.bfloat16
    assert jnp.allclose(y.astype(jnp.float32), ref.astype(jnp.float32),
                        atol=5e-2, rtol=5e-2)

    # Ragged-M case (batch*seq not a multiple of the row tile) exercises row padding.
    x2 = jax.random.normal(jax.random.PRNGKey(1), (2, 7, in_dim), jnp.float32)
    y2 = jax.block_until_ready(module(x2))
    ref2 = _reference(x2, module)
    assert y2.shape == (2, 7, out_dim)
    assert jnp.allclose(y2.astype(jnp.float32), ref2.astype(jnp.float32),
                        atol=5e-2, rtol=5e-2)

    print("KERNEL_OK")
</pallas_src>

<mosaic_0001>
module attributes {stable_mosaic.version = 11 : i64} {
  func.func @_embedding_table_kernel(%arg0: i32, %arg1: i32, %arg2: memref<16x33xbf16, #tpu.memory_space<vmem>>, %arg3: memref<33x256xbf16, #tpu.memory_space<vmem>>, %arg4: memref<256x128xbf16, #tpu.memory_space<vmem>>, %arg5: memref<16x128xbf16, #tpu.memory_space<vmem>>, %arg6: memref<16x1xf32, #tpu.memory_space<vmem>>, %arg7: memref<16x1xf32, #tpu.memory_space<vmem>>, %arg8: memref<16x128xf32, #tpu.memory_space<vmem>>) attributes {dimension_semantics = [#tpu.dimension_semantics<parallel>, #tpu.dimension_semantics<arbitrary>], iteration_bounds = array<i64: 1, 1>, scalar_prefetch = 0 : i64, scratch_operands = 3 : i64, tpu.core_type = #tpu.core_type<tc>, window_params = [{transform_indices = @transform_0, window_bounds = array<i64: 16, 33>}, {transform_indices = @transform_1, window_bounds = array<i64: 33, 256>}, {transform_indices = @transform_2, window_bounds = array<i64: 256, 128>}, {transform_indices = @transform_3, window_bounds = array<i64: 16, 128>}]} {
    %c0_i32 = arith.constant 0 : i32
    %0 = arith.cmpi eq, %arg1, %c0_i32 : i32
    %1 = arith.extui %0 : i1 to i32
    %c0_i32_0 = arith.constant 0 : i32
    %2 = arith.cmpi ne, %1, %c0_i32_0 : i32
    scf.if %2 {
      %cst_23 = arith.constant 0xFF800000 : f32
      %33 = vector.broadcast %cst_23 : f32 to vector<16x1xf32>
      %c0_24 = arith.constant 0 : index
      %c0_25 = arith.constant 0 : index
      %34 = vector.load %arg6[%c0_24, %c0_25] : memref<16x1xf32, #tpu.memory_space<vmem>>, vector<16x1xf32>
      tpu.vector_store %arg6[%c0_24, %c0_25], %33 {strides = array<i32>} : memref<16x1xf32, #tpu.memory_space<vmem>>, vector<16x1xf32>,
      %cst_26 = arith.constant 0.000000e+00 : f32
      %35 = vector.broadcast %cst_26 : f32 to vector<16x1xf32>
      %c0_27 = arith.constant 0 : index
      %c0_28 = arith.constant 0 : index
      %36 = vector.load %arg7[%c0_27, %c0_28] : memref<16x1xf32, #tpu.memory_space<vmem>>, vector<16x1xf32>
      tpu.vector_store %arg7[%c0_27, %c0_28], %35 {strides = array<i32>} : memref<16x1xf32, #tpu.memory_space<vmem>>, vector<16x1xf32>,
      %cst_29 = arith.constant 0.000000e+00 : f32
      %37 = vector.broadcast %cst_29 : f32 to vector<16x128xf32>
      %c0_30 = arith.constant 0 : index
      %c0_31 = arith.constant 0 : index
      %38 = vector.load %arg8[%c0_30, %c0_31] : memref<16x128xf32, #tpu.memory_space<vmem>>, vector<16x128xf32>
      tpu.vector_store %arg8[%c0_30, %c0_31], %37 {strides = array<i32>} : memref<16x128xf32, #tpu.memory_space<vmem>>, vector<16x128xf32>,
    } else {
    }
    %c0 = arith.constant 0 : index
    %c0_1 = arith.constant 0 : index
    %3 = vector.load %arg2[%c0, %c0_1] : memref<16x33xbf16, #tpu.memory_space<vmem>>, vector<16x33xbf16>
    %c0_2 = arith.constant 0 : index
    %c0_3 = arith.constant 0 : index
    %4 = vector.load %arg3[%c0_2, %c0_3] : memref<33x256xbf16, #tpu.memory_space<vmem>>, vector<33x256xbf16>
    %cst = arith.constant dense<0.000000e+00> : vector<16x256xf32>
    %5 = tpu.matmul %3, %4, %cst {dimension_numbers = #tpu.dot_dimension_numbers<[1], [0], [0], [1], [0, 0, 1, 1], [], []>} : vector<16x33xbf16>, vector<33x256xbf16>, vector<16x256xf32> -> vector<16x256xf32>
    %c0_4 = arith.constant 0 : index
    %c0_5 = arith.constant 0 : index
    %6 = vector.load %arg6[%c0_4, %c0_5] : memref<16x1xf32, #tpu.memory_space<vmem>>, vector<16x1xf32>
    %cst_6 = arith.constant dense<0xFF800000> : vector<16xf32>
    %7 = vector.multi_reduction <maximumf>, %5, %cst_6 [1] : vector<16x256xf32> to vector<16xf32>
    %8 = vector.shape_cast %7 : vector<16xf32> to vector<16x1xf32>
    %9 = arith.maximumf %6, %8 : vector<16x1xf32>
    %10 = arith.subf %6, %9 : vector<16x1xf32>
    %11 = math.exp %10 : vector<16x1xf32>
    %12 = vector.broadcast %9 : vector<16x1xf32> to vector<16x256xf32>
    %13 = arith.subf %5, %12 : vector<16x256xf32>
    %14 = math.exp %13 : vector<16x256xf32>
    %c0_7 = arith.constant 0 : index
    %c0_8 = arith.constant 0 : index
    %15 = vector.load %arg7[%c0_7, %c0_8] : memref<16x1xf32, #tpu.memory_space<vmem>>, vector<16x1xf32>
    %16 = arith.mulf %11, %15 : vector<16x1xf32>
    %cst_9 = arith.constant dense<0.000000e+00> : vector<16xf32>
    %17 = vector.multi_reduction <add>, %14, %cst_9 [1] : vector<16x256xf32> to vector<16xf32>
    %18 = vector.shape_cast %17 : vector<16xf32> to vector<16x1xf32>
    %19 = arith.addf %16, %18 : vector<16x1xf32>
    %c0_10 = arith.constant 0 : index
    %c0_11 = arith.constant 0 : index
    %20 = vector.load %arg7[%c0_10, %c0_11] : memref<16x1xf32, #tpu.memory_space<vmem>>, vector<16x1xf32>
    tpu.vector_store %arg7[%c0_10, %c0_11], %19 {strides = array<i32>} : memref<16x1xf32, #tpu.memory_space<vmem>>, vector<16x1xf32>,
    %c0_12 = arith.constant 0 : index
    %c0_13 = arith.constant 0 : index
    %21 = vector.load %arg8[%c0_12, %c0_13] : memref<16x128xf32, #tpu.memory_space<vmem>>, vector<16x128xf32>
    %22 = vector.broadcast %11 : vector<16x1xf32> to vector<16x128xf32>
    %23 = arith.mulf %22, %21 : vector<16x128xf32>
    %24 = arith.truncf %14 : vector<16x256xf32> to vector<16x256xbf16>
    %c0_14 = arith.constant 0 : index
    %c0_15 = arith.constant 0 : index
    %25 = vector.load %arg4[%c0_14, %c0_15] : memref<256x128xbf16, #tpu.memory_space<vmem>>, vector<256x128xbf16>
    %cst_16 = arith.constant dense<0.000000e+00> : vector<16x128xf32>
    %26 = tpu.matmul %24, %25, %cst_16 {dimension_numbers = #tpu.dot_dimension_numbers<[1], [0], [0], [1], [0, 0, 1, 1], [], []>} : vector<16x256xbf16>, vector<256x128xbf16>, vector<16x128xf32> -> vector<16x128xf32>
    %27 = arith.addf %23, %26 : vector<16x128xf32>
    %c0_17 = arith.constant 0 : index
    %c0_18 = arith.constant 0 : index
    %28 = vector.load %arg8[%c0_17, %c0_18] : memref<16x128xf32, #tpu.memory_space<vmem>>, vector<16x128xf32>
    tpu.vector_store %arg8[%c0_17, %c0_18], %27 {strides = array<i32>} : memref<16x128xf32, #tpu.memory_space<vmem>>, vector<16x128xf32>,
    %c0_19 = arith.constant 0 : index
    %c0_20 = arith.constant 0 : index
    %29 = vector.load %arg6[%c0_19, %c0_20] : memref<16x1xf32, #tpu.memory_space<vmem>>, vector<16x1xf32>
    tpu.vector_store %arg6[%c0_19, %c0_20], %9 {strides = array<i32>} : memref<16x1xf32, #tpu.memory_space<vmem>>, vector<16x1xf32>,
    %c0_i32_21 = arith.constant 0 : i32
    %30 = arith.cmpi eq, %arg1, %c0_i32_21 : i32
    %31 = arith.extui %30 : i1 to i32
    %c0_i32_22 = arith.constant 0 : i32
    %32 = arith.cmpi ne, %31, %c0_i32_22 : i32
    scf.if %32 {
      %c0_23 = arith.constant 0 : index
      %c0_24 = arith.constant 0 : index
      %33 = vector.load %arg7[%c0_23, %c0_24] : memref<16x1xf32, #tpu.memory_space<vmem>>, vector<16x1xf32>
      %34 = tpu.reciprocal %33 {approx = true} : vector<16x1xf32> -> vector<16x1xf32>
      %c0_25 = arith.constant 0 : index
      %c0_26 = arith.constant 0 : index
      %35 = vector.load %arg8[%c0_25, %c0_26] : memref<16x128xf32, #tpu.memory_space<vmem>>, vector<16x128xf32>
      %36 = vector.broadcast %34 : vector<16x1xf32> to vector<16x128xf32>
      %37 = arith.mulf %35, %36 : vector<16x128xf32>
      %38 = arith.truncf %37 : vector<16x128xf32> to vector<16x128xbf16>
      %c0_27 = arith.constant 0 : index
      %c0_28 = arith.constant 0 : index
      %39 = vector.load %arg5[%c0_27, %c0_28] : memref<16x128xbf16, #tpu.memory_space<vmem>>, vector<16x128xbf16>
      tpu.vector_store %arg5[%c0_27, %c0_28], %38 {strides = array<i32>} : memref<16x128xbf16, #tpu.memory_space<vmem>>, vector<16x128xbf16>,
    } else {
    }
    return
  }
  func.func @transform_0(%arg0: i32, %arg1: i32) -> (i32, i32) {
    %c0_i32 = arith.constant 0 : i32
    %c0_i32_0 = arith.constant 0 : i32
    return %arg0, %c0_i32 : i32, i32
  }
  func.func @transform_1(%arg0: i32, %arg1: i32) -> (i32, i32) {
    %c0_i32 = arith.constant 0 : i32
    %c0_i32_0 = arith.constant 0 : i32
    return %c0_i32, %arg1 : i32, i32
  }
  func.func @transform_2(%arg0: i32, %arg1: i32) -> (i32, i32) {
    %c0_i32 = arith.constant 0 : i32
    %c0_i32_0 = arith.constant 0 : i32
    return %arg1, %c0_i32 : i32, i32
  }
  func.func @transform_3(%arg0: i32, %arg1: i32) -> (i32, i32) {
    %c0_i32 = arith.constant 0 : i32
    %c0_i32_0 = arith.constant 0 : i32
    return %arg0, %c0_i32 : i32, i32
  }
}

</mosaic_0001>

<llo_original>
// kernel: tpu_custom_call.1
$region0: #{tpu_custom_call.1}
  #allocation0 [shape = 'u32[]', space=smem, size = 0x4, offset = 0x4, fixed_abs, tag = 'smem constant byte address 0x4 - core index']
  #allocation1 [shape = 'u32[144,128]{1,0:T(1,128)}', space=vmem, size = 0x12000, scoped, tag = 'internal scratch']
  #allocation2 [shape = 'f32[16,1]{1,0:T(8,128)}', space=vmem, size = 0x2000, scoped, tag = 'scratch operand']
  #allocation3 [shape = 'f32[16,1]{1,0:T(8,128)}', space=vmem, size = 0x2000, scoped, tag = 'scratch operand']
  #allocation4 [shape = 'f32[16,128]{1,0:T(8,128)}', space=vmem, size = 0x2000, scoped, tag = 'scratch operand']
  %s0 = inlined_call_operand.hbm [shape: bf16[16,33], index: 0, kind: input, shape index: {}]
  %s1 = inlined_call_operand.hbm [shape: bf16[33,256], index: 1, kind: input, shape index: {}]
  %s2 = inlined_call_operand.hbm [shape: bf16[256,128], index: 2, kind: input, shape index: {}]
  %s3 = inlined_call_operand.hbm [shape: bf16[16,128], index: 3, kind: output, shape index: {}]
  %s4 = sld [smem:[#allocation0]]
  $region42: #{tpu_custom_call.1} parent=0
    _
  %s6 = ssub.s32 1, %s4
  %s7 = scalar_select 0, %s6, %s4
  $region1: #{tpu_custom_call.1} parent=0
    #allocation5 [shape = 'u8[4096]{0}', space=vmem, size = 0x1000, scoped, tag = 'input window, operand 0, single buffered']
    #allocation6 [shape = 's32[1]{0}', space=sflag, size = 0x4, scoped, tag = 'scoped memory for tpu_custom_call.1']
    #allocation7 [shape = 's32[1]{0}', space=sflag, size = 0x4, scoped, tag = 'scoped memory for tpu_custom_call.1']
    #allocation8 [shape = 'u8[20480]{0}', space=vmem, size = 0x5000, scoped, tag = 'input window, operand 1, single buffered']
    #allocation9 [shape = 's32[1]{0}', space=sflag, size = 0x4, scoped, tag = 'scoped memory for tpu_custom_call.1']
    #allocation10 [shape = 'u8[65536]{0}', space=vmem, size = 0x10000, scoped, tag = 'input window, operand 2, single buffered']
    #allocation11 [shape = 'u8[4096]{0}', space=vmem, size = 0x1000, scoped, tag = 'output window, operand 0, single buffered']
    %8 = vsyncpa [#allocation6], 0
    %9 = vsyncpa [#allocation9], 0
    %10 = vsyncpa [#allocation7], 0
    // Predicated region
    $region2: #{tpu_custom_call.1} parent=1 // pred_check
      _
    $region3: #{tpu_custom_call.1} parent=1 // pred_check_branch
      %12 = sbr.rel (0) target = $region5
    $region4: #{tpu_custom_call.1} parent=1 // pred_region
      %s14 = ssub.s32 128, 128
      %15 = vsyncadd [#allocation6], %s14
      %s16 = sshll.u32 [#allocation5], 4
      %s17 = int_to_ptr.vmem [resolvable:$true] %s16
      %22 = dma.hbm_to_vmem [thread:$0]  %s0, 128, %s17, [#allocation6], 64, 64, 4
    $region5: #{tpu_custom_call.1} parent=1 // pred_fallthru
      _
    // Predicated region
    $region6: #{tpu_custom_call.1} parent=1 // pred_check
      _
    $region7: #{tpu_custom_call.1} parent=1 // pred_check_branch
      %24 = sbr.rel (0) target = $region9
    $region8: #{tpu_custom_call.1} parent=1 // pred_region
      %s26 = ssub.s32 640, 640
      %27 = vsyncadd [#allocation9], %s26
      %s28 = sshll.u32 [#allocation8], 4
      %s29 = int_to_ptr.vmem [resolvable:$true] %s28
      %34 = dma.hbm_to_vmem [thread:$0]  %s1, 640, %s29, [#allocation9], 128, 128, 8
    $region9: #{tpu_custom_call.1} parent=1 // pred_fallthru
      _
    // Predicated region
    $region10: #{tpu_custom_call.1} parent=1 // pred_check
      _
    $region11: #{tpu_custom_call.1} parent=1 // pred_check_branch
      %36 = sbr.rel (0) target = $region13
    $region12: #{tpu_custom_call.1} parent=1 // pred_region
      %s38 = ssub.s32 2048, 2048
      %39 = vsyncadd [#allocation9], %s38
      %s40 = sshll.u32 [#allocation10], 4
      %s41 = int_to_ptr.vmem [resolvable:$true] %s40
      %46 = dma.hbm_to_vmem [thread:$0]  %s2, 2048, %s41, [#allocation9], 64, 64, 4
    $region13: #{tpu_custom_call.1} parent=1 // pred_fallthru
      _
    // Predicated region
    $region14: #{tpu_custom_call.1} parent=1 // pred_check
      _
    $region15: #{tpu_custom_call.1} parent=1 // pred_check_branch
      %48 = sbr.rel (0) target = $region17
    $region16: #{tpu_custom_call.1} parent=1 // pred_region
      %49 = dma.done [#allocation6], 128
    $region17: #{tpu_custom_call.1} parent=1 // pred_fallthru
      _
    // Predicated region
    $region18: #{tpu_custom_call.1} parent=1 // pred_check
      _
    $region19: #{tpu_custom_call.1} parent=1 // pred_check_branch
      %51 = sbr.rel (0) target = $region21
    $region20: #{tpu_custom_call.1} parent=1 // pred_region
      %52 = dma.done [#allocation9], 640
    $region21: #{tpu_custom_call.1} parent=1 // pred_fallthru
      _
    // Predicated region
    $region22: #{tpu_custom_call.1} parent=1 // pred_check
      _
    $region23: #{tpu_custom_call.1} parent=1 // pred_check_branch
      %54 = sbr.rel (0) target = $region25
    $region24: #{tpu_custom_call.1} parent=1 // pred_region
      %55 = dma.done [#allocation9], 2048
    $region25: #{tpu_custom_call.1} parent=1 // pred_fallthru
      _
    %p57 = scmp.eq.s32.totalorder 0, 0
    // Predicated region
    $region26: #{tpu_custom_call.1} parent=1 // pred_check
      %p58 = pneg %p57
    $region27: #{tpu_custom_call.1} parent=1 // pred_check_branch
      %60 = sbr.rel (%p58) target = $region29
    $region28: #{tpu_custom_call.1} parent=1 // pred_region
      %vm61 = vcmask 7168
      %62 = vst.msk [vmem:[#allocation2] sm:$0xff] %vm61, -inf
      %63 = vst.msk [vmem:[#allocation2 + $0x8] sm:$0xff] %vm61, -inf
      %64 = vst.msk [vmem:[#allocation3] sm:$0xff] %vm61, 0.0
      %65 = vst.msk [vmem:[#allocation3 + $0x8] sm:$0xff] %vm61, 0.0
      %66 = vst [vmem:[#allocation4] sm:$0xff] 0.0
      %67 = vst [vmem:[#allocation4 + $0x8] sm:$0xff] 0.0
    $region29: #{tpu_custom_call.1} parent=1 // pred_fallthru
      _
    %v68 = vld [vmem:[#allocation5] sm:$0xf]
    %v69 = vld [vmem:[#allocation5 + $0x4] sm:$0xf]
    %v70 = vld [vmem:[#allocation8] sm:$0xff]
    %v71 = vld [vmem:[#allocation8 + $0x8] sm:$0xff]
    %v72 = vld [vmem:[#allocation8 + $0x10] sm:$0xff]
    %v73 = vld [vmem:[#allocation8 + $0x18] sm:$0xff]
    %v74 = vld [vmem:[#allocation8 + $0x20] sm:$0x11]
    %v77 = vunpack.c.l.b16 %v68
    %v78 = vunpack.c.l.b16 %v69
    %v79 = vpack.c.b16 %v78, %v77
    %v85 = vunpack.c.l.b16 %v70
    %v86 = vunpack.c.h.b16 %v70
    %v87 = vunpack.c.l.b16 %v71
    %v88 = vunpack.c.h.b16 %v71
    %v89 = vunpack.c.l.b16 %v72
    %v90 = vunpack.c.h.b16 %v72
    %v91 = vunpack.c.l.b16 %v73
    %v92 = vunpack.c.h.b16 %v73
    %v93 = vunpack.c.l.b16 %v74
    %v94 = vunpack.c.h.b16 %v74
    %v95 = vpack.c.b16 %v87, %v85
    %v96 = vpack.c.b16 %v88, %v86
    %v97 = vpack.c.b16 %v91, %v89
    %v98 = vpack.c.b16 %v92, %v90
    %v99 = vpack.c.b16 %v93, %v93
    %v100 = vpack.c.b16 %v94, %v94
    %vm105 = vcmask 269312
    %v107 = vsel %vm105, %v79, 0
    %vm109 = vcmask 1040384
    %v110 = vsel 0, 4294967295, 65535
    %v111 = vsel %vm109, %v110, 0
    %v113 = vand.u32 %v99, %v111
    %v116 = vand.u32 %v100, %v111
    %118 = vmatprep.subr.bf16.mxu0 0
    %119 = vmatpush1.bf16.msra.mxu0 0
    %120 = vmatprep.subr.bf16.mxu0 0
    %121 = vmatpush1.bf16.msra.mxu0 0
    %122 = vmatprep.subr.bf16.mxu0 0
    %123 = vmatpush1.bf16.msra.mxu0 0
    %124 = vmatprep.subr.bf16.mxu0 0
    %125 = vmatpush1.bf16.msra.mxu0 0
    %126 = vmatprep.subr.bf16.mxu0 0
    %127 = vmatpush1.bf16.msra.mxu0 0
    %128 = vmatprep.subr.bf16.mxu0 %v116
    %129 = vmatpush1.bf16.msra.mxu0 %v113
    %130 = vmatprep.subr.bf16.mxu0 %v98
    %131 = vmatpush1.bf16.msra.mxu0 %v97
    %132 = vmatprep.subr.bf16.mxu0 %v96
    %133 = vmatpush1.bf16.msra.mxu0 %v95
    %134 = vmatprep.subr.bf16.mxu0 0
    %135 = vmatpush2.bf16.msra.mxu0 0
    %136 = vmatprep.subr.bf16.mxu0 0
    %137 = vmatpush2.bf16.msra.mxu0 0
    %138 = vmatprep.subr.bf16.mxu0 0
    %139 = vmatpush2.bf16.msra.mxu0 0
    %140 = vmatprep.subr.bf16.mxu0 0
    %141 = vmatpush2.bf16.msra.mxu0 0
    %142 = vmatprep.subr.bf16.mxu0 0
    %143 = vmatpush2.bf16.msra.mxu0 0
    %144 = vmatprep.subr.bf16.mxu0 0
    %145 = vmatpush2.bf16.msra.mxu0 0
    %146 = vmatprep.subr.bf16.mxu0 0
    %147 = vmatpush2.bf16.msra.mxu0 0
    %148 = vmatprep.subr.bf16.mxu0 0
    %149 = vmatpush2.bf16.msra.mxu0 0
    %150 = vmatprep.mubr.bf16.mxu0 0
    %151 = vmatmul.mubr.bf16.gmra.mxu0 %v107
    %v152 = vpop.f32.mrf.mxu0
    %v153 = vadd.f32 0.0, %v152
    %v154 = vpop.f32.mrf.mxu0
    %v155 = vadd.f32 0.0, %v154
    %v156 = vpop.f32.mrf.mxu0
    %v157 = vadd.f32 0.0, %v156
    %v158 = vpop.f32.mrf.mxu0
    %v159 = vadd.f32 0.0, %v158
    %160 = vdwg.mxu0
    %v161 = vld [vmem:[#allocation2] sm:$0xff]
    %v162 = vld [vmem:[#allocation2 + $0x8] sm:$0xff]
    %v163 = vmax.f32 %v153, %v155
    %164 = vmax.xlane.f32.xlu0 %v163
    %v165 = vpop.xlane.xlu0 %164
    %v166 = vmax.f32 %v157, %v159
    %167 = vmax.xlane.f32.xlu0 %v166
    %v168 = vpop.xlane.xlu0 %167
    %v169 = vmax.f32 %v161, %v165
    %v170 = vmax.f32 %v162, %v168
    %v171 = vsub.f32 %v161, %v169
    %v172 = vsub.f32 %v162, %v170
    %v173 = vmul.f32 %v171, 1.442695
    %v174 = vpow.pop %v173
    %v175 = vmul.f32 %v172, 1.442695
    %v176 = vpow.pop %v175
    %178 = vset.pattern.permute.xlu0 0
    %179 = vperm.xlu0 %178, %v169
    %v180 = vpop.permute.xlu0 %179
    %183 = vset.pattern.permute.xlu0 0
    %184 = vperm.xlu0 %183, %v170
    %v185 = vpop.permute.xlu0 %184
    %v187 = vsub.f32 %v153, %v180
    %v188 = vsub.f32 %v155, %v180
    %v189 = vsub.f32 %v157, %v185
    %v190 = vsub.f32 %v159, %v185
    %v191 = vmul.f32 %v187, 1.442695
    %v192 = vpow.pop %v191
    %v193 = vmul.f32 %v188, 1.442695
    %v194 = vpow.pop %v193
    %v195 = vmul.f32 %v189, 1.442695
    %v196 = vpow.pop %v195
    %v197 = vmul.f32 %v190, 1.442695
    %v198 = vpow.pop %v197
    %v199 = vld [vmem:[#allocation3] sm:$0xff]
    %v200 = vld [vmem:[#allocation3 + $0x8] sm:$0xff]
    %v201 = vmul.f32 %v174, %v199
    %v202 = vmul.f32 %v176, %v200
    %v203 = vadd.f32 %v192, %v194
    %204 = vadd.xlane.f32.xlu0 %v203
    %v205 = vpop.xlane.xlu0 %204
    %v206 = vadd.f32 %v196, %v198
    %207 = vadd.xlane.f32.xlu0 %v206
    %v208 = vpop.xlane.xlu0 %207
    %v209 = vadd.f32 %v201, %v205
    %v210 = vadd.f32 %v202, %v208
    %vm211 = vcmask 7168
    %212 = vst.msk [vmem:[#allocation3] sm:$0xff] %vm211, %v209
    %213 = vst.msk [vmem:[#allocation3 + $0x8] sm:$0xff] %vm211, %v210
    %v214 = vld [vmem:[#allocation4] sm:$0xff]
    %v215 = vld [vmem:[#allocation4 + $0x8] sm:$0xff]
    %217 = vset.pattern.permute.xlu0 0
    %218 = vperm.xlu0 %217, %v174
    %v219 = vpop.permute.xlu0 %218
    %222 = vset.pattern.permute.xlu0 0
    %223 = vperm.xlu0 %222, %v176
    %v224 = vpop.permute.xlu0 %223
    %v226 = vmul.f32 %v219, %v214
    %v227 = vmul.f32 %v224, %v215
    %v228 = vpack.c.bf16 %v196, %v192
    %v229 = vpack.c.bf16 %v198, %v194
    %v230 = vld [vmem:[#allocation10] sm:$0xf]
    %v231 = vld [vmem:[#allocation10 + $0x4] sm:$0xf]
    %v232 = vld [vmem:[#allocation10 + $0x8] sm:$0xf]
    %v233 = vld [vmem:[#allocation10 + $0xc] sm:$0xf]
    %v234 = vld [vmem:[#allocation10 + $0x10] sm:$0xf]
    %v235 = vld [vmem:[#allocation10 + $0x14] sm:$0xf]
    %v236 = vld [vmem:[#allocation10 + $0x18] sm:$0xf]
    %v237 = vld [vmem:[#allocation10 + $0x1c] sm:$0xf]
    %v238 = vld [vmem:[#allocation10 + $0x20] sm:$0xf]
    %v239 = vld [vmem:[#allocation10 + $0x24] sm:$0xf]
    %v240 = vld [vmem:[#allocation10 + $0x28] sm:$0xf]
    %v241 = vld [vmem:[#allocation10 + $0x2c] sm:$0xf]
    %v242 = vld [vmem:[#allocation10 + $0x30] sm:$0xf]
    %v243 = vld [vmem:[#allocation10 + $0x34] sm:$0xf]
    %v244 = vld [vmem:[#allocation10 + $0x38] sm:$0xf]
    %v245 = vld [vmem:[#allocation10 + $0x3c] sm:$0xf]
    %v246 = vld [vmem:[#allocation10 + $0x40] sm:$0xf]
    %v247 = vld [vmem:[#allocation10 + $0x44] sm:$0xf]
    %v248 = vld [vmem:[#allocation10 + $0x48] sm:$0xf]
    %v249 = vld [vmem:[#allocation10 + $0x4c] sm:$0xf]
    %v250 = vld [vmem:[#allocation10 + $0x50] sm:$0xf]
    %v251 = vld [vmem:[#allocation10 + $0x54] sm:$0xf]
    %v252 = vld [vmem:[#allocation10 + $0x58] sm:$0xf]
    %v253 = vld [vmem:[#allocation10 + $0x5c] sm:$0xf]
    %v254 = vld [vmem:[#allocation10 + $0x60] sm:$0xf]
    %v255 = vld [vmem:[#allocation10 + $0x64] sm:$0xf]
    %v256 = vld [vmem:[#allocation10 + $0x68] sm:$0xf]
    %v257 = vld [vmem:[#allocation10 + $0x6c] sm:$0xf]
    %v258 = vld [vmem:[#allocation10 + $0x70] sm:$0xf]
    %v259 = vld [vmem:[#allocation10 + $0x74] sm:$0xf]
    %v260 = vld [vmem:[#allocation10 + $0x78] sm:$0xf]
    %v261 = vld [vmem:[#allocation10 + $0x7c] sm:$0xf]
    %v294 = vunpack.c.l.b16 %v230
    %v295 = vunpack.c.l.b16 %v231
    %v296 = vunpack.c.l.b16 %v232
    %v297 = vunpack.c.l.b16 %v233
    %v298 = vunpack.c.l.b16 %v234
    %v299 = vunpack.c.l.b16 %v235
    %v300 = vunpack.c.l.b16 %v236
    %v301 = vunpack.c.l.b16 %v237
    %v302 = vunpack.c.l.b16 %v238
    %v303 = vunpack.c.l.b16 %v239
    %v304 = vunpack.c.l.b16 %v240
    %v305 = vunpack.c.l.b16 %v241
    %v306 = vunpack.c.l.b16 %v242
    %v307 = vunpack.c.l.b16 %v243
    %v308 = vunpack.c.l.b16 %v244
    %v309 = vunpack.c.l.b16 %v245
    %v310 = vunpack.c.l.b16 %v246
    %v311 = vunpack.c.l.b16 %v247
    %v312 = vunpack.c.l.b16 %v248
    %v313 = vunpack.c.l.b16 %v249
    %v314 = vunpack.c.l.b16 %v250
    %v315 = vunpack.c.l.b16 %v251
    %v316 = vunpack.c.l.b16 %v252
    %v317 = vunpack.c.l.b16 %v253
    %v318 = vunpack.c.l.b16 %v254
    %v319 = vunpack.c.l.b16 %v255
    %v320 = vunpack.c.l.b16 %v256
    %v321 = vunpack.c.l.b16 %v257
    %v322 = vunpack.c.l.b16 %v258
    %v323 = vunpack.c.l.b16 %v259
    %v324 = vunpack.c.l.b16 %v260
    %v325 = vunpack.c.l.b16 %v261
    %v326 = vpack.c.b16 %v295, %v294
    %v327 = vpack.c.b16 %v297, %v296
    %v328 = vpack.c.b16 %v299, %v298
    %v329 = vpack.c.b16 %v301, %v300
    %v330 = vpack.c.b16 %v303, %v302
    %v331 = vpack.c.b16 %v305, %v304
    %v332 = vpack.c.b16 %v307, %v306
    %v333 = vpack.c.b16 %v309, %v308
    %v334 = vpack.c.b16 %v311, %v310
    %v335 = vpack.c.b16 %v313, %v312
    %v336 = vpack.c.b16 %v315, %v314
    %v337 = vpack.c.b16 %v317, %v316
    %v338 = vpack.c.b16 %v319, %v318
    %v339 = vpack.c.b16 %v321, %v320
    %v340 = vpack.c.b16 %v323, %v322
    %v341 = vpack.c.b16 %v325, %v324
    %358 = vmatprep.subr.bf16.mxu0 0
    %359 = vmatpush1.bf16.msra.mxu0 %v333
    %360 = vmatprep.subr.bf16.mxu0 0
    %361 = vmatpush1.bf16.msra.mxu0 %v332
    %362 = vmatprep.subr.bf16.mxu0 0
    %363 = vmatpush1.bf16.msra.mxu0 %v331
    %364 = vmatprep.subr.bf16.mxu0 0
    %365 = vmatpush1.bf16.msra.mxu0 %v330
    %366 = vmatprep.subr.bf16.mxu0 0
    %367 = vmatpush1.bf16.msra.mxu0 %v329
    %368 = vmatprep.subr.bf16.mxu0 0
    %369 = vmatpush1.bf16.msra.mxu0 %v328
    %370 = vmatprep.subr.bf16.mxu0 0
    %371 = vmatpush1.bf16.msra.mxu0 %v327
    %372 = vmatprep.subr.bf16.mxu0 0
    %373 = vmatpush1.bf16.msra.mxu0 %v326
    %374 = vmatprep.subr.bf16.mxu0 0
    %375 = vmatpush2.bf16.msra.mxu0 %v341
    %376 = vmatprep.subr.bf16.mxu0 0
    %377 = vmatpush2.bf16.msra.mxu0 %v340
    %378 = vmatprep.subr.bf16.mxu0 0
    %379 = vmatpush2.bf16.msra.mxu0 %v339
    %380 = vmatprep.subr.bf16.mxu0 0
    %381 = vmatpush2.bf16.msra.mxu0 %v338
    %382 = vmatprep.subr.bf16.mxu0 0
    %383 = vmatpush2.bf16.msra.mxu0 %v337
    %384 = vmatprep.subr.bf16.mxu0 0
    %385 = vmatpush2.bf16.msra.mxu0 %v336
    %386 = vmatprep.subr.bf16.mxu0 0
    %387 = vmatpush2.bf16.msra.mxu0 %v335
    %388 = vmatprep.subr.bf16.mxu0 0
    %389 = vmatpush2.bf16.msra.mxu0 %v334
    %390 = vmatprep.mubr.bf16.mxu0 %v229
    %391 = vmatmul.mubr.bf16.gmra.mxu0 %v228
    %v392 = vpop.f32.mrf.mxu0
    %v393 = vadd.f32 0.0, %v392
    %v394 = vpop.f32.mrf.mxu0
    %v395 = vpop.f32.mrf.mxu0
    %v396 = vadd.f32 0.0, %v395
    %v397 = vpop.f32.mrf.mxu0
    %398 = vdwg.mxu0
    %v399 = vadd.f32 %v226, %v393
    %v400 = vadd.f32 %v227, %v396
    %401 = vst [vmem:[#allocation4] sm:$0xff] %v399
    %402 = vst [vmem:[#allocation4 + $0x8] sm:$0xff] %v400
    %403 = vst.msk [vmem:[#allocation2] sm:$0xff] %vm211, %v169
    %404 = vst.msk [vmem:[#allocation2 + $0x8] sm:$0xff] %vm211, %v170
    // Predicated region
    $region30: #{tpu_custom_call.1} parent=1 // pred_check
      %p405 = pneg %p57
    $region31: #{tpu_custom_call.1} parent=1 // pred_check_branch
      %407 = sbr.rel (%p405) target = $region33
    $region32: #{tpu_custom_call.1} parent=1 // pred_region
      %v408 = vld [vmem:[#allocation3] sm:$0xff]
      %v409 = vld [vmem:[#allocation3 + $0x8] sm:$0xff]
      %v410 = vrcp.pop %v408
      %v411 = vrcp.pop %v409
      %v412 = vld [vmem:[#allocation4] sm:$0xff]
      %v413 = vld [vmem:[#allocation4 + $0x8] sm:$0xff]
      %415 = vset.pattern.permute.xlu0 0
      %416 = vperm.xlu0 %415, %v410
      %v417 = vpop.permute.xlu0 %416
      %420 = vset.pattern.permute.xlu0 0
      %421 = vperm.xlu0 %420, %v411
      %v422 = vpop.permute.xlu0 %421
      %v424 = vmul.f32 %v412, %v417
      %v425 = vmul.f32 %v413, %v422
      %v426 = vpack.c.bf16 %v425, %v424
      %v428 = vunpack.c.l.b16 %v426
      %v429 = vunpack.c.h.b16 %v426
      %v430 = vpack.c.b16 %v428, %v428
      %v431 = vpack.c.b16 %v429, %v429
      %434 = vst [vmem:[#allocation11] sm:$0xf] %v430
      %435 = vst [vmem:[#allocation11 + $0x4] sm:$0xf] %v431
    $region33: #{tpu_custom_call.1} parent=1 // pred_fallthru
      _
    // Predicated region
    $region34: #{tpu_custom_call.1} parent=1 // pred_check
      _
    $region35: #{tpu_custom_call.1} parent=1 // pred_check_branch
      %437 = sbr.rel (0) target = $region37
    $region36: #{tpu_custom_call.1} parent=1 // pred_region
      %s439 = ssub.s32 128, 128
      %440 = vsyncadd [#allocation7], %s439
      %s441 = sshll.u32 [#allocation11], 4
      %s442 = int_to_ptr.vmem [resolvable:$true] %s441
      %447 = dma.vmem_to_hbm [thread:$0]  %s442, 128, %s3, [#allocation7], 64, 64, 4
    $region37: #{tpu_custom_call.1} parent=1 // pred_fallthru
      _
    // Predicated region
    $region38: #{tpu_custom_call.1} parent=1 // pred_check
      _
    $region39: #{tpu_custom_call.1} parent=1 // pred_check_branch
      %449 = sbr.rel (0) target = $region41
    $region40: #{tpu_custom_call.1} parent=1 // pred_region
      %450 = dma.done [#allocation7], 128
    $region41: #{tpu_custom_call.1} parent=1 // pred_fallthru
      _
    %451 = vsyncpa [#allocation6], 1
    %452 = vsyncpa [#allocation9], 1
    %453 = vsyncpa [#allocation7], 1

</llo_original>
